<compile_context>
chip_gen: v6e
topology: v6e:2x2x1
jax: 0.10.0
libtpu: 0.0.40
codegen_flags: <defaults>
</compile_context>

<pallas_src>
from functools import partial
from math import gcd

import jax
import jax.numpy as jnp
from jax import lax
from jax.experimental import pallas as pl
from jax.experimental.pallas import tpu as pltpu

_B0 = 0.1  # BModule b0


# ---------------------------------------------------------------------------
# Kernel
# ---------------------------------------------------------------------------
def _vp_kernel(u_ref, noise_ref, coef_ref, std_ref, *rest, pack, with_mean):
    """u_t = coef*u + std*noise [; mean = coef*u] on lane-dense (rows, pack*D) tiles."""
    if pack > 1:
        expand_ref, rest = rest[0], rest[1:]
    else:
        expand_ref = None
    ut_ref = rest[0]
    mean_ref = rest[1] if with_mean else None

    u = u_ref[...].astype(jnp.float32)          # (TB, pack*D)
    noise = noise_ref[...].astype(jnp.float32)  # (TB, pack*D)
    coef = coef_ref[...]                        # (TB, pack) float32
    std = std_ref[...]                          # (TB, pack) float32

    if expand_ref is None:
        # pack == 1 -> coef/std are (TB, 1) and broadcast over the D lanes.
        coef_b, std_b = coef, std
    else:
        # Expand each per-row scalar across its D lanes via a 0/1 selection
        # matmul (TB, pack) @ (pack, pack*D); the expand matrix is a constant
        # input (index_map (0,0)) so it is DMA'd once.  HIGHEST precision so
        # f32 coef/std are not rounded to bf16; MXU is otherwise idle here.
        expand = expand_ref[...]
        coef_b = jnp.dot(coef, expand, precision=lax.Precision.HIGHEST,
                         preferred_element_type=jnp.float32)
        std_b = jnp.dot(std, expand, precision=lax.Precision.HIGHEST,
                        preferred_element_type=jnp.float32)

    mean = coef_b * u
    if mean_ref is not None:
        mean_ref[...] = mean.astype(mean_ref.dtype)
    ut_ref[...] = (mean + std_b * noise).astype(ut_ref.dtype)


# ---------------------------------------------------------------------------
# Wrapper helpers
# ---------------------------------------------------------------------------
def _int_beta(t, b0, b1):
    return b0 * t + (b1 - b0) * (t * t * 0.5)


def _sublane_multiple(dtype):
    # f32 -> 8, bf16/f16 -> 16, int8/fp8 -> 32
    return max(8, 32 // jnp.dtype(dtype).itemsize)


def _generation_params(n_streams):
    """Pick VMEM limit / tile target / min grid steps per TPU generation."""
    try:
        info = pltpu.get_tpu_info()
        vmem_cap = getattr(info, "vmem_capacity_bytes", None) or (64 << 20)
    except Exception:
        vmem_cap = 64 << 20  # conservative: assume v7x-sized VMEM
    if vmem_cap >= (96 << 20):           # v5e / v6e: 128 MiB physical VMEM
        vmem_limit = 64 << 20
        target_tile = 4 << 20
        min_grid_steps = 4
    else:                                # v7x: 64 MiB physical VMEM per TC
        vmem_limit = 48 << 20
        target_tile = 3 << 20
        min_grid_steps = 8               # >=4 steps per TensorCore
    # n_streams double-buffered tiles must fit well inside the limit.
    max_tile = max(1 << 16, (vmem_limit * 3 // 4) // (2 * n_streams))
    return vmem_limit, min(target_tile, max_tile), min_grid_steps


def _choose_block_rows(n_rows, row_bytes, sublane, *, target_tile_bytes,
                       min_grid_steps):
    """Largest sublane-aligned tile <= target, with >=min_grid_steps for big data."""
    rows = max(sublane, target_tile_bytes // max(1, row_bytes))
    rows = max(sublane, (rows // sublane) * sublane)
    total_bytes = n_rows * row_bytes
    if total_bytes >= (4 << 20) and min_grid_steps > 1:
        cap = -(-n_rows // min_grid_steps)              # ceil
        cap = max(sublane, -(-cap // sublane) * sublane)
        rows = min(rows, cap)
    if rows >= n_rows:
        return n_rows                                   # whole (small) batch, one tile
    return rows
    # TODO(synk): if a single packed row ever exceeds the per-stream VMEM
    # budget (row_bytes * sublane too large), block along the lane dim too.


# ---------------------------------------------------------------------------
# Public forward
# ---------------------------------------------------------------------------
def vp_forward(u, t, noise, s=None, *, max_beta=20.0,
               store_mean_in_kernel=True,
               small_fallback_bytes=256 << 10):
    """Pallas-backed equivalent of VP.forward / sample_from_transition_kernel."""
    B, D = u.shape
    b1 = float(max_beta)
    itemsize = jnp.dtype(u.dtype).itemsize

    # Per-row scalar math in float32 in the wrapper (tiny (B,) work): keeps
    # lane-width-1 tensors and transcendentals out of the streaming kernel.
    t32 = t.reshape(B).astype(jnp.float32)
    bt = _int_beta(t32, _B0, b1)
    if s is None:
        bs = jnp.zeros_like(bt)
    else:
        bs = _int_beta(s.reshape(B).astype(jnp.float32), _B0, b1)
    db = bt - bs
    coef = jnp.exp(-0.5 * db)          # transition_mean_coefficient
    var = -jnp.expm1(-db)              # == 1 - exp(-db), accurate for small db
    std = jnp.sqrt(var)                # transition_std (NaN if s > t, as in torch)

    def _pack_dict(u_t, mean):
        return {"u": u, "u_t": u_t, "noise": noise, "mean_coef": coef,
                "std": std, "var": var, "mean": mean, "t": t, "s": s}

    # Small-input fast path: kernel launch overhead dwarfs <few-hundred-KiB
    # of HBM traffic; XLA fusion already hits roofline there.
    if small_fallback_bytes and B * D * itemsize <= small_fallback_bytes:
        u32 = u.astype(jnp.float32)
        n32 = noise.astype(jnp.float32)
        mean32 = coef[:, None] * u32
        u_t = (mean32 + std[:, None] * n32).astype(u.dtype)
        return _pack_dict(u_t, mean32.astype(u.dtype))

    # ---- lane-dense packing: k consecutive batch rows -> one row whose
    # last dim (k*D) is a multiple of 128 -> unmasked full-lane loads/stores.
    pack = 128 // gcd(D, 128)
    B_pad = -(-B // pack) * pack
    if B_pad != B:
        padr = B_pad - B
        u_in = jnp.pad(u, ((0, padr), (0, 0)))
        n_in = jnp.pad(noise, ((0, padr), (0, 0)))
        coef_in = jnp.pad(coef, ((0, padr),))
        std_in = jnp.pad(std, ((0, padr),))
    else:
        u_in, n_in, coef_in, std_in = u, noise, coef, std

    Bp, Dp = B_pad // pack, pack * D
    u_p = u_in.reshape(Bp, Dp)
    n_p = n_in.reshape(Bp, Dp)
    coef_p = coef_in.reshape(Bp, pack)
    std_p = std_in.reshape(Bp, pack)

    n_streams = 4 if store_mean_in_kernel else 3       # u, noise, u_t [, mean]
    vmem_limit, target_tile, min_steps = _generation_params(n_streams)
    sublane = _sublane_multiple(u.dtype)
    block_rows = _choose_block_rows(Bp, Dp * itemsize, sublane,
                                    target_tile_bytes=target_tile,
                                    min_grid_steps=min_steps)
    grid = (pl.cdiv(Bp, block_rows),)

    data_spec = pl.BlockSpec((block_rows, Dp), lambda i: (i, 0))
    scal_spec = pl.BlockSpec((block_rows, pack), lambda i: (i, 0))

    in_specs = [data_spec, data_spec, scal_spec, scal_spec]
    operands = [u_p, n_p, coef_p, std_p]
    if pack > 1:
        # Precompute the 0/1 lane-expansion matrix once in the wrapper; pass
        # it with a constant index_map so it is DMA'd a single time.
        col_group = jnp.arange(pack * D, dtype=jnp.int32) // D
        expand = (col_group[None, :] ==
                  jnp.arange(pack, dtype=jnp.int32)[:, None]).astype(jnp.float32)
        in_specs.append(pl.BlockSpec((pack, Dp), lambda i: (0, 0)))
        operands.append(expand)

    if store_mean_in_kernel:
        out_shape = (jax.ShapeDtypeStruct((Bp, Dp), u.dtype),   # u_t (packed)
                     jax.ShapeDtypeStruct((Bp, Dp), u.dtype))   # mean (packed)
        out_specs = [data_spec, data_spec]
    else:
        out_shape = jax.ShapeDtypeStruct((Bp, Dp), u.dtype)     # u_t only
        out_specs = data_spec

    result = pl.pallas_call(
        partial(_vp_kernel, pack=pack, with_mean=store_mean_in_kernel),
        out_shape=out_shape,
        grid_spec=pltpu.PrefetchScalarGridSpec(
            num_scalar_prefetch=0,
            grid=grid,
            in_specs=in_specs,
            out_specs=out_specs,
        ),
        compiler_params=pltpu.CompilerParams(
            dimension_semantics=("parallel",),
            vmem_limit_bytes=vmem_limit,
        ),
    )(*operands)

    if store_mean_in_kernel:
        ut_p, mean_p = result
        u_t = ut_p.reshape(B_pad, D)[:B]
        mean = mean_p.reshape(B_pad, D)[:B]
    else:
        u_t = result.reshape(B_pad, D)[:B]
        # Lazy XLA recompute; only materialized if the caller consumes it.
        mean = (coef[:, None] * u.astype(jnp.float32)).astype(u.dtype)

    return _pack_dict(u_t, mean)


# ---------------------------------------------------------------------------
# Pure-JAX reference (mirrors the PyTorch code, 1 - exp form)
# ---------------------------------------------------------------------------
def _vp_forward_ref(u, t, noise, s=None, *, max_beta=20.0):
    b0, b1 = _B0, float(max_beta)
    int_beta = lambda x: b0 * x + (b1 - b0) * (x ** 2 / 2.0)
    bt = int_beta(t)
    bs = jnp.zeros_like(t) if s is None else int_beta(s)
    coef = jnp.exp(-0.5 * (bt - bs))
    var = 1.0 - jnp.exp(-(bt - bs))
    std = jnp.sqrt(var)
    mean = coef[:, None] * u
    u_t = mean + noise * std[:, None]
    return u_t, mean, coef, std, var


def _assert_close(out, ut_r, mean_r, coef_r, std_r, var_r):
    assert jnp.allclose(out["u_t"], ut_r, atol=1e-5, rtol=1e-4)
    assert jnp.allclose(out["mean"], mean_r, atol=1e-5, rtol=1e-4)
    assert jnp.allclose(out["mean_coef"], coef_r, atol=1e-5, rtol=1e-4)
    assert jnp.allclose(out["std"], std_r, atol=1e-5, rtol=1e-4)
    assert jnp.allclose(out["var"], var_r, atol=1e-5, rtol=1e-4)


if __name__ == "__main__":
    # VP(d=32, max_beta=20.0)
    d = 32
    max_beta = 20.0

    key = jax.random.PRNGKey(0)
    k_u, k_t, k_n, k_u2, k_t2, k_n2 = jax.random.split(key, 6)

    # --- case 1: s=None, B divisible by pack, Pallas path forced ------------
    B = 8
    u = jax.random.normal(k_u, (B, d), dtype=jnp.float32)
    t = jax.random.uniform(k_t, (B,), dtype=jnp.float32)
    # TODO(synk): torch.randn_like noise is generated host-side with jax.random
    # (no in-kernel PRNG needed for parity of the math).
    noise = jax.random.normal(k_n, (B, d), dtype=jnp.float32)

    out = vp_forward(u, t, noise, s=None, max_beta=max_beta,
                     small_fallback_bytes=0)          # force Pallas kernel
    jax.block_until_ready(out["u_t"])
    _assert_close(out, *_vp_forward_ref(u, t, noise, s=None, max_beta=max_beta))

    # --- case 2: s given, B NOT divisible by pack (exercise batch padding) --
    B2 = 10
    u2 = jax.random.normal(k_u2, (B2, d), dtype=jnp.float32)
    t2 = jax.random.uniform(k_t2, (B2,), dtype=jnp.float32)
    noise2 = jax.random.normal(k_n2, (B2, d), dtype=jnp.float32)
    s2 = 0.5 * t2
    out2 = vp_forward(u2, t2, noise2, s=s2, max_beta=max_beta,
                      small_fallback_bytes=0)
    jax.block_until_ready(out2["u_t"])
    _assert_close(out2, *_vp_forward_ref(u2, t2, noise2, s=s2, max_beta=max_beta))

    # --- case 3: mean write dropped from the kernel (25% less HBM traffic) --
    out3 = vp_forward(u2, t2, noise2, s=s2, max_beta=max_beta,
                      small_fallback_bytes=0, store_mean_in_kernel=False)
    jax.block_until_ready(out3["u_t"])
    _assert_close(out3, *_vp_forward_ref(u2, t2, noise2, s=s2, max_beta=max_beta))

    # --- case 4: default small-input fast path (no pallas_call) -------------
    out4 = vp_forward(u, t, noise, s=None, max_beta=max_beta)
    jax.block_until_ready(out4["u_t"])
    _assert_close(out4, *_vp_forward_ref(u, t, noise, s=None, max_beta=max_beta))

    print("KERNEL_OK")
</pallas_src>

<mosaic_0001>
module attributes {stable_mosaic.version = 11 : i64} {
  func.func @_vp_kernel(%arg0: i32, %arg1: memref<2x128xf32, #tpu.memory_space<vmem>>, %arg2: memref<2x128xf32, #tpu.memory_space<vmem>>, %arg3: memref<2x4xf32, #tpu.memory_space<vmem>>, %arg4: memref<2x4xf32, #tpu.memory_space<vmem>>, %arg5: memref<4x128xf32, #tpu.memory_space<vmem>>, %arg6: memref<2x128xf32, #tpu.memory_space<vmem>>, %arg7: memref<2x128xf32, #tpu.memory_space<vmem>>) attributes {dimension_semantics = [#tpu.dimension_semantics<parallel>], iteration_bounds = array<i64: 1>, scalar_prefetch = 0 : i64, scratch_operands = 0 : i64, tpu.core_type = #tpu.core_type<tc>, window_params = [{transform_indices = @transform_0, window_bounds = array<i64: 2, 128>}, {transform_indices = @transform_1, window_bounds = array<i64: 2, 128>}, {transform_indices = @transform_2, window_bounds = array<i64: 2, 4>}, {transform_indices = @transform_3, window_bounds = array<i64: 2, 4>}, {pipeline_mode = #tpu.pipeline_mode<synchronous>, transform_indices = @transform_4, window_bounds = array<i64: 4, 128>}, {transform_indices = @transform_5, window_bounds = array<i64: 2, 128>}, {transform_indices = @transform_6, window_bounds = array<i64: 2, 128>}]} {
    %c0 = arith.constant 0 : index
    %c0_0 = arith.constant 0 : index
    %0 = vector.load %arg1[%c0, %c0_0] : memref<2x128xf32, #tpu.memory_space<vmem>>, vector<2x128xf32>
    %c0_1 = arith.constant 0 : index
    %c0_2 = arith.constant 0 : index
    %1 = vector.load %arg2[%c0_1, %c0_2] : memref<2x128xf32, #tpu.memory_space<vmem>>, vector<2x128xf32>
    %c0_3 = arith.constant 0 : index
    %c0_4 = arith.constant 0 : index
    %2 = vector.load %arg3[%c0_3, %c0_4] : memref<2x4xf32, #tpu.memory_space<vmem>>, vector<2x4xf32>
    %c0_5 = arith.constant 0 : index
    %c0_6 = arith.constant 0 : index
    %3 = vector.load %arg4[%c0_5, %c0_6] : memref<2x4xf32, #tpu.memory_space<vmem>>, vector<2x4xf32>
    %c0_7 = arith.constant 0 : index
    %c0_8 = arith.constant 0 : index
    %4 = vector.load %arg5[%c0_7, %c0_8] : memref<4x128xf32, #tpu.memory_space<vmem>>, vector<4x128xf32>
    %cst = arith.constant dense<0.000000e+00> : vector<2x128xf32>
    %5 = tpu.matmul %2, %4, %cst {dimension_numbers = #tpu.dot_dimension_numbers<[1], [0], [0], [1], [0, 0, 1, 1], [], []>, precision = #tpu.contract_precision<fp32>} : vector<2x4xf32>, vector<4x128xf32>, vector<2x128xf32> -> vector<2x128xf32>
    %cst_9 = arith.constant dense<0.000000e+00> : vector<2x128xf32>
    %6 = tpu.matmul %3, %4, %cst_9 {dimension_numbers = #tpu.dot_dimension_numbers<[1], [0], [0], [1], [0, 0, 1, 1], [], []>, precision = #tpu.contract_precision<fp32>} : vector<2x4xf32>, vector<4x128xf32>, vector<2x128xf32> -> vector<2x128xf32>
    %7 = arith.mulf %5, %0 : vector<2x128xf32>
    %c0_10 = arith.constant 0 : index
    %c0_11 = arith.constant 0 : index
    %8 = vector.load %arg7[%c0_10, %c0_11] : memref<2x128xf32, #tpu.memory_space<vmem>>, vector<2x128xf32>
    tpu.vector_store %arg7[%c0_10, %c0_11], %7 {strides = array<i32>} : memref<2x128xf32, #tpu.memory_space<vmem>>, vector<2x128xf32>,
    %9 = arith.mulf %6, %1 : vector<2x128xf32>
    %10 = arith.addf %7, %9 : vector<2x128xf32>
    %c0_12 = arith.constant 0 : index
    %c0_13 = arith.constant 0 : index
    %11 = vector.load %arg6[%c0_12, %c0_13] : memref<2x128xf32, #tpu.memory_space<vmem>>, vector<2x128xf32>
    tpu.vector_store %arg6[%c0_12, %c0_13], %10 {strides = array<i32>} : memref<2x128xf32, #tpu.memory_space<vmem>>, vector<2x128xf32>,
    return
  }
  func.func @transform_0(%arg0: i32) -> (i32, i32) {
    %c0_i32 = arith.constant 0 : i32
    %c0_i32_0 = arith.constant 0 : i32
    return %arg0, %c0_i32 : i32, i32
  }
  func.func @transform_1(%arg0: i32) -> (i32, i32) {
    %c0_i32 = arith.constant 0 : i32
    %c0_i32_0 = arith.constant 0 : i32
    return %arg0, %c0_i32 : i32, i32
  }
  func.func @transform_2(%arg0: i32) -> (i32, i32) {
    %c0_i32 = arith.constant 0 : i32
    %c0_i32_0 = arith.constant 0 : i32
    return %arg0, %c0_i32 : i32, i32
  }
  func.func @transform_3(%arg0: i32) -> (i32, i32) {
    %c0_i32 = arith.constant 0 : i32
    %c0_i32_0 = arith.constant 0 : i32
    return %arg0, %c0_i32 : i32, i32
  }
  func.func @transform_4(%arg0: i32) -> (i32, i32) {
    %c0_i32 = arith.constant 0 : i32
    %c0_i32_0 = arith.constant 0 : i32
    %c0_i32_1 = arith.constant 0 : i32
    return %c0_i32, %c0_i32_0 : i32, i32
  }
  func.func @transform_5(%arg0: i32) -> (i32, i32) {
    %c0_i32 = arith.constant 0 : i32
    %c0_i32_0 = arith.constant 0 : i32
    return %arg0, %c0_i32 : i32, i32
  }
  func.func @transform_6(%arg0: i32) -> (i32, i32) {
    %c0_i32 = arith.constant 0 : i32
    %c0_i32_0 = arith.constant 0 : i32
    return %arg0, %c0_i32 : i32, i32
  }
}

</mosaic_0001>

<llo_original>
// kernel: tpu_custom_call.1
$region0: #{tpu_custom_call.1}
  #allocation0 [shape = 'u32[]', space=smem, size = 0x4, offset = 0x4, fixed_abs, tag = 'smem constant byte address 0x4 - core index']
  #allocation1 [shape = 'u32[144,128]{1,0:T(1,128)}', space=vmem, size = 0x12000, scoped, tag = 'internal scratch']
  %s0 = inlined_call_operand.hbm [shape: f32[2,128], index: 0, kind: input, shape index: {}]
  %s1 = inlined_call_operand.hbm [shape: f32[2,128], index: 1, kind: input, shape index: {}]
  %s2 = inlined_call_operand.vmem [shape: f32[2,4], index: 2, kind: input, shape index: {}]
  %s3 = inlined_call_operand.hbm [shape: f32[2,4], index: 3, kind: input, shape index: {}]
  %s4 = inlined_call_operand.vmem [shape: f32[4,128], index: 4, kind: input, shape index: {}]
  %s5 = inlined_call_operand.hbm [shape: f32[2,128], index: 5, kind: output, shape index: {0}]
  %s6 = inlined_call_operand.hbm [shape: f32[2,128], index: 6, kind: output, shape index: {1}]
  %7 = xla_tuple %s5, %s6
  %s8 = sld [smem:[#allocation0]]
  $region50: #{tpu_custom_call.1} parent=0
    _
  %s10 = ssub.s32 1, %s8
  %s11 = scalar_select 0, %s10, %s8
  $region1: #{tpu_custom_call.1} parent=0
    #allocation2 [shape = 'u8[1024]{0}', space=vmem, size = 0x400, scoped, tag = 'input window, operand 0, single buffered']
    #allocation3 [shape = 's32[1]{0}', space=sflag, size = 0x4, scoped, tag = 'scoped memory for tpu_custom_call.1']
    #allocation4 [shape = 's32[1]{0}', space=sflag, size = 0x4, scoped, tag = 'scoped memory for tpu_custom_call.1']
    #allocation5 [shape = 'u8[1024]{0}', space=vmem, size = 0x400, scoped, tag = 'input window, operand 1, single buffered']
    #allocation6 [shape = 's32[1]{0}', space=sflag, size = 0x4, scoped, tag = 'scoped memory for tpu_custom_call.1']
    #allocation7 [shape = 'u8[1024]{0}', space=vmem, size = 0x400, scoped, tag = 'input window, operand 3, single buffered']
    #allocation8 [shape = 'u8[1024]{0}', space=vmem, size = 0x400, scoped, tag = 'output window, operand 0, single buffered']
    #allocation9 [shape = 'u8[1024]{0}', space=vmem, size = 0x400, scoped, tag = 'output window, operand 1, single buffered']
    #allocation10 [shape = 's32[1]{0}', space=sflag, size = 0x4, scoped, tag = 'scoped memory for tpu_custom_call.1']
    %12 = vsyncpa [#allocation3], 0
    %13 = vsyncpa [#allocation6], 0
    %14 = vsyncpa [#allocation4], 0
    %15 = vsyncpa [#allocation10], 0
    // Predicated region
    $region2: #{tpu_custom_call.1} parent=1 // pred_check
      _
    $region3: #{tpu_custom_call.1} parent=1 // pred_check_branch
      %17 = sbr.rel (0) target = $region5
    $region4: #{tpu_custom_call.1} parent=1 // pred_region
      %s19 = ssub.s32 32, 32
      %20 = vsyncadd [#allocation3], %s19
      %s22 = sshll.u32 [#allocation2], 4
      %s23 = int_to_ptr.vmem [resolvable:$true] %s22
      %25 = dma.hbm_to_vmem [thread:$0]  %s0, 32, %s23, [#allocation3]
    $region5: #{tpu_custom_call.1} parent=1 // pred_fallthru
      _
    // Predicated region
    $region6: #{tpu_custom_call.1} parent=1 // pred_check
      _
    $region7: #{tpu_custom_call.1} parent=1 // pred_check_branch
      %27 = sbr.rel (0) target = $region9
    $region8: #{tpu_custom_call.1} parent=1 // pred_region
      %s29 = ssub.s32 32, 32
      %30 = vsyncadd [#allocation6], %s29
      %s32 = sshll.u32 [#allocation5], 4
      %s33 = int_to_ptr.vmem [resolvable:$true] %s32
      %35 = dma.hbm_to_vmem [thread:$0]  %s1, 32, %s33, [#allocation6]
    $region9: #{tpu_custom_call.1} parent=1 // pred_fallthru
      _
    // Predicated region
    $region10: #{tpu_custom_call.1} parent=1 // pred_check
      _
    $region11: #{tpu_custom_call.1} parent=1 // pred_check_branch
      %37 = sbr.rel (0) target = $region13
    $region12: #{tpu_custom_call.1} parent=1 // pred_region
      _
    $region13: #{tpu_custom_call.1} parent=1 // pred_fallthru
      _
    // Predicated region
    $region14: #{tpu_custom_call.1} parent=1 // pred_check
      _
    $region15: #{tpu_custom_call.1} parent=1 // pred_check_branch
      %39 = sbr.rel (0) target = $region17
    $region16: #{tpu_custom_call.1} parent=1 // pred_region
      %s41 = ssub.s32 32, 32
      %42 = vsyncadd [#allocation6], %s41
      %s44 = sshll.u32 [#allocation7], 4
      %s45 = int_to_ptr.vmem [resolvable:$true] %s44
      %47 = dma.hbm_to_vmem [thread:$0]  %s3, 32, %s45, [#allocation6]
    $region17: #{tpu_custom_call.1} parent=1 // pred_fallthru
      _
    // Predicated region
    $region18: #{tpu_custom_call.1} parent=1 // pred_check
      _
    $region19: #{tpu_custom_call.1} parent=1 // pred_check_branch
      %49 = sbr.rel (0) target = $region21
    $region20: #{tpu_custom_call.1} parent=1 // pred_region
      _
    $region21: #{tpu_custom_call.1} parent=1 // pred_fallthru
      _
    // Predicated region
    $region22: #{tpu_custom_call.1} parent=1 // pred_check
      _
    $region23: #{tpu_custom_call.1} parent=1 // pred_check_branch
      %51 = sbr.rel (0) target = $region25
    $region24: #{tpu_custom_call.1} parent=1 // pred_region
      %52 = dma.done [#allocation3], 32
    $region25: #{tpu_custom_call.1} parent=1 // pred_fallthru
      _
    // Predicated region
    $region26: #{tpu_custom_call.1} parent=1 // pred_check
      _
    $region27: #{tpu_custom_call.1} parent=1 // pred_check_branch
      %54 = sbr.rel (0) target = $region29
    $region28: #{tpu_custom_call.1} parent=1 // pred_region
      %55 = dma.done [#allocation6], 32
    $region29: #{tpu_custom_call.1} parent=1 // pred_fallthru
      _
    // Predicated region
    $region30: #{tpu_custom_call.1} parent=1 // pred_check
      _
    $region31: #{tpu_custom_call.1} parent=1 // pred_check_branch
      %57 = sbr.rel (0) target = $region33
    $region32: #{tpu_custom_call.1} parent=1 // pred_region
      %58 = dma.done [#allocation6], 32
    $region33: #{tpu_custom_call.1} parent=1 // pred_fallthru
      _
    %v59 = vld [vmem:[#allocation2] sm:$0x3]
    %v60 = vld [vmem:[#allocation5] sm:$0x3]
    %v61 = vld [vmem:[%s2] sm:$0x3]
    %v62 = vld [vmem:[#allocation7] sm:$0x3]
    %v63 = vld [vmem:[%s4] sm:$0xf]
    %vm64 = vcmask 31744
    %v66 = vsel %vm64, %v61, 0
    %vm68 = vcmask 1043456
    %v70 = vsel %vm68, %v63, 0
    %72 = vmatprep.subr.mxu0 0.0
    %73 = vmatpush1.msra.mxu0 0.0
    %74 = vmatprep.subr.mxu0 0.0
    %75 = vmatpush1.msra.mxu0 0.0
    %76 = vmatprep.subr.mxu0 0.0
    %77 = vmatpush1.msra.mxu0 0.0
    %78 = vmatprep.subr.mxu0 0.0
    %79 = vmatpush1.msra.mxu0 0.0
    %80 = vmatprep.subr.mxu0 0.0
    %81 = vmatpush1.msra.mxu0 0.0
    %82 = vmatprep.subr.mxu0 0.0
    %83 = vmatpush1.msra.mxu0 0.0
    %84 = vmatprep.subr.mxu0 0.0
    %85 = vmatpush1.msra.mxu0 0.0
    %86 = vmatprep.subr.mxu0 0.0
    %87 = vmatpush1.msra.mxu0 0.0
    %88 = vmatprep.subr.mxu0 0.0
    %89 = vmatpush1.msra.mxu0 0.0
    %90 = vmatprep.subr.mxu0 0.0
    %91 = vmatpush1.msra.mxu0 0.0
    %92 = vmatprep.subr.mxu0 0.0
    %93 = vmatpush1.msra.mxu0 0.0
    %94 = vmatprep.subr.mxu0 0.0
    %95 = vmatpush1.msra.mxu0 0.0
    %96 = vmatprep.subr.mxu0 0.0
    %97 = vmatpush1.msra.mxu0 0.0
    %98 = vmatprep.subr.mxu0 0.0
    %99 = vmatpush1.msra.mxu0 0.0
    %100 = vmatprep.subr.mxu0 0.0
    %101 = vmatpush1.msra.mxu0 0.0
    %102 = vmatprep.subr.mxu0 0.0
    %v103 = vand.u32 %v70, 4294901760
    %104 = vmatpush1.msra.mxu0 %v103
    %105 = vmatprep.subr.mxu0 0.0
    %106 = vmatpush2.msra.mxu0 0.0
    %107 = vmatprep.subr.mxu0 0.0
    %108 = vmatpush2.msra.mxu0 0.0
    %109 = vmatprep.subr.mxu0 0.0
    %110 = vmatpush2.msra.mxu0 0.0
    %111 = vmatprep.subr.mxu0 0.0
    %112 = vmatpush2.msra.mxu0 0.0
    %113 = vmatprep.subr.mxu0 0.0
    %114 = vmatpush2.msra.mxu0 0.0
    %115 = vmatprep.subr.mxu0 0.0
    %116 = vmatpush2.msra.mxu0 0.0
    %117 = vmatprep.subr.mxu0 0.0
    %118 = vmatpush2.msra.mxu0 0.0
    %119 = vmatprep.subr.mxu0 0.0
    %120 = vmatpush2.msra.mxu0 0.0
    %121 = vmatprep.subr.mxu0 0.0
    %122 = vmatpush2.msra.mxu0 0.0
    %123 = vmatprep.subr.mxu0 0.0
    %124 = vmatpush2.msra.mxu0 0.0
    %125 = vmatprep.subr.mxu0 0.0
    %126 = vmatpush2.msra.mxu0 0.0
    %127 = vmatprep.subr.mxu0 0.0
    %128 = vmatpush2.msra.mxu0 0.0
    %129 = vmatprep.subr.mxu0 0.0
    %130 = vmatpush2.msra.mxu0 0.0
    %131 = vmatprep.subr.mxu0 0.0
    %132 = vmatpush2.msra.mxu0 0.0
    %133 = vmatprep.subr.mxu0 0.0
    %134 = vmatpush2.msra.mxu0 0.0
    %135 = vmatprep.subr.mxu0 0.0
    %136 = vmatpush2.msra.mxu0 0.0
    %137 = vmatprep.mubr.f32.mxu0 0.0
    %v138 = vand.u32 %v66, 4294901760
    %v139 = vsub.f32 %v66, %v138
    %v140 = vand.u32 %v139, 4294901760
    %v141 = vsub.f32 %v139, %v140
    %v142 = vand.u32 %v141, 4294901760
    %143 = vmatmul.mubr.f32.gmra.mxu0 %v142
    %v144 = vpop.f32.mrf.mxu0
    %v145 = vadd.f32 0.0, %v144
    %v146 = vpop.f32.mrf.mxu0
    %147 = vdwg.mxu0
    %148 = vmatprep.subr.mxu0 0.0
    %149 = vmatpush1.msra.mxu0 0.0
    %150 = vmatprep.subr.mxu0 0.0
    %151 = vmatpush1.msra.mxu0 0.0
    %152 = vmatprep.subr.mxu0 0.0
    %153 = vmatpush1.msra.mxu0 0.0
    %154 = vmatprep.subr.mxu0 0.0
    %155 = vmatpush1.msra.mxu0 0.0
    %156 = vmatprep.subr.mxu0 0.0
    %157 = vmatpush1.msra.mxu0 0.0
    %158 = vmatprep.subr.mxu0 0.0
    %159 = vmatpush1.msra.mxu0 0.0
    %160 = vmatprep.subr.mxu0 0.0
    %161 = vmatpush1.msra.mxu0 0.0
    %162 = vmatprep.subr.mxu0 0.0
    %163 = vmatpush1.msra.mxu0 0.0
    %164 = vmatprep.subr.mxu0 0.0
    %165 = vmatpush1.msra.mxu0 0.0
    %166 = vmatprep.subr.mxu0 0.0
    %167 = vmatpush1.msra.mxu0 0.0
    %168 = vmatprep.subr.mxu0 0.0
    %169 = vmatpush1.msra.mxu0 0.0
    %170 = vmatprep.subr.mxu0 0.0
    %171 = vmatpush1.msra.mxu0 0.0
    %172 = vmatprep.subr.mxu0 0.0
    %173 = vmatpush1.msra.mxu0 0.0
    %174 = vmatprep.subr.mxu0 0.0
    %175 = vmatpush1.msra.mxu0 0.0
    %176 = vmatprep.subr.mxu0 0.0
    %177 = vmatpush1.msra.mxu0 0.0
    %178 = vmatprep.subr.mxu0 0.0
    %v179 = vand.u32 %v70, 4294901760
    %v180 = vsub.f32 %v70, %v179
    %v181 = vand.u32 %v180, 4294901760
    %v182 = vsub.f32 %v180, %v181
    %v183 = vand.u32 %v182, 4294901760
    %184 = vmatpush1.msra.mxu0 %v183
    %185 = vmatprep.subr.mxu0 0.0
    %186 = vmatpush2.msra.mxu0 0.0
    %187 = vmatprep.subr.mxu0 0.0
    %188 = vmatpush2.msra.mxu0 0.0
    %189 = vmatprep.subr.mxu0 0.0
    %190 = vmatpush2.msra.mxu0 0.0
    %191 = vmatprep.subr.mxu0 0.0
    %192 = vmatpush2.msra.mxu0 0.0
    %193 = vmatprep.subr.mxu0 0.0
    %194 = vmatpush2.msra.mxu0 0.0
    %195 = vmatprep.subr.mxu0 0.0
    %196 = vmatpush2.msra.mxu0 0.0
    %197 = vmatprep.subr.mxu0 0.0
    %198 = vmatpush2.msra.mxu0 0.0
    %199 = vmatprep.subr.mxu0 0.0
    %200 = vmatpush2.msra.mxu0 0.0
    %201 = vmatprep.subr.mxu0 0.0
    %202 = vmatpush2.msra.mxu0 0.0
    %203 = vmatprep.subr.mxu0 0.0
    %204 = vmatpush2.msra.mxu0 0.0
    %205 = vmatprep.subr.mxu0 0.0
    %206 = vmatpush2.msra.mxu0 0.0
    %207 = vmatprep.subr.mxu0 0.0
    %208 = vmatpush2.msra.mxu0 0.0
    %209 = vmatprep.subr.mxu0 0.0
    %210 = vmatpush2.msra.mxu0 0.0
    %211 = vmatprep.subr.mxu0 0.0
    %212 = vmatpush2.msra.mxu0 0.0
    %213 = vmatprep.subr.mxu0 0.0
    %214 = vmatpush2.msra.mxu0 0.0
    %215 = vmatprep.subr.mxu0 0.0
    %216 = vmatpush2.msra.mxu0 0.0
    %217 = vmatprep.mubr.f32.mxu0 0.0
    %v218 = vand.u32 %v66, 4294901760
    %219 = vmatmul.mubr.f32.gmra.mxu0 %v218
    %v220 = vpop.f32.mrf.mxu0
    %v221 = vadd.f32 %v145, %v220
    %v222 = vpop.f32.mrf.mxu0
    %223 = vdwg.mxu0
    %224 = vmatprep.subr.mxu0 0.0
    %225 = vmatpush1.msra.mxu0 0.0
    %226 = vmatprep.subr.mxu0 0.0
    %227 = vmatpush1.msra.mxu0 0.0
    %228 = vmatprep.subr.mxu0 0.0
    %229 = vmatpush1.msra.mxu0 0.0
    %230 = vmatprep.subr.mxu0 0.0
    %231 = vmatpush1.msra.mxu0 0.0
    %232 = vmatprep.subr.mxu0 0.0
    %233 = vmatpush1.msra.mxu0 0.0
    %234 = vmatprep.subr.mxu0 0.0
    %235 = vmatpush1.msra.mxu0 0.0
    %236 = vmatprep.subr.mxu0 0.0
    %237 = vmatpush1.msra.mxu0 0.0
    %238 = vmatprep.subr.mxu0 0.0
    %239 = vmatpush1.msra.mxu0 0.0
    %240 = vmatprep.subr.mxu0 0.0
    %241 = vmatpush1.msra.mxu0 0.0
    %242 = vmatprep.subr.mxu0 0.0
    %243 = vmatpush1.msra.mxu0 0.0
    %244 = vmatprep.subr.mxu0 0.0
    %245 = vmatpush1.msra.mxu0 0.0
    %246 = vmatprep.subr.mxu0 0.0
    %247 = vmatpush1.msra.mxu0 0.0
    %248 = vmatprep.subr.mxu0 0.0
    %249 = vmatpush1.msra.mxu0 0.0
    %250 = vmatprep.subr.mxu0 0.0
    %251 = vmatpush1.msra.mxu0 0.0
    %252 = vmatprep.subr.mxu0 0.0
    %253 = vmatpush1.msra.mxu0 0.0
    %254 = vmatprep.subr.mxu0 0.0
    %v255 = vand.u32 %v70, 4294901760
    %v256 = vsub.f32 %v70, %v255
    %257 = vmatpush1.msra.mxu0 %v256
    %258 = vmatprep.subr.mxu0 0.0
    %259 = vmatpush2.msra.mxu0 0.0
    %260 = vmatprep.subr.mxu0 0.0
    %261 = vmatpush2.msra.mxu0 0.0
    %262 = vmatprep.subr.mxu0 0.0
    %263 = vmatpush2.msra.mxu0 0.0
    %264 = vmatprep.subr.mxu0 0.0
    %265 = vmatpush2.msra.mxu0 0.0
    %266 = vmatprep.subr.mxu0 0.0
    %267 = vmatpush2.msra.mxu0 0.0
    %268 = vmatprep.subr.mxu0 0.0
    %269 = vmatpush2.msra.mxu0 0.0
    %270 = vmatprep.subr.mxu0 0.0
    %271 = vmatpush2.msra.mxu0 0.0
    %272 = vmatprep.subr.mxu0 0.0
    %273 = vmatpush2.msra.mxu0 0.0
    %274 = vmatprep.subr.mxu0 0.0
    %275 = vmatpush2.msra.mxu0 0.0
    %276 = vmatprep.subr.mxu0 0.0
    %277 = vmatpush2.msra.mxu0 0.0
    %278 = vmatprep.subr.mxu0 0.0
    %279 = vmatpush2.msra.mxu0 0.0
    %280 = vmatprep.subr.mxu0 0.0
    %281 = vmatpush2.msra.mxu0 0.0
    %282 = vmatprep.subr.mxu0 0.0
    %283 = vmatpush2.msra.mxu0 0.0
    %284 = vmatprep.subr.mxu0 0.0
    %285 = vmatpush2.msra.mxu0 0.0
    %286 = vmatprep.subr.mxu0 0.0
    %287 = vmatpush2.msra.mxu0 0.0
    %288 = vmatprep.subr.mxu0 0.0
    %289 = vmatpush2.msra.mxu0 0.0
    %290 = vmatprep.mubr.f32.mxu0 0.0
    %v291 = vand.u32 %v66, 4294901760
    %v292 = vsub.f32 %v66, %v291
    %293 = vmatmul.mubr.f32.gmra.mxu0 %v292
    %v294 = vpop.f32.mrf.mxu0
    %v295 = vadd.f32 %v221, %v294
    %v296 = vpop.f32.mrf.mxu0
    %297 = vdwg.mxu0
    %298 = vmatprep.subr.mxu0 0.0
    %299 = vmatpush1.msra.mxu0 0.0
    %300 = vmatprep.subr.mxu0 0.0
    %301 = vmatpush1.msra.mxu0 0.0
    %302 = vmatprep.subr.mxu0 0.0
    %303 = vmatpush1.msra.mxu0 0.0
    %304 = vmatprep.subr.mxu0 0.0
    %305 = vmatpush1.msra.mxu0 0.0
    %306 = vmatprep.subr.mxu0 0.0
    %307 = vmatpush1.msra.mxu0 0.0
    %308 = vmatprep.subr.mxu0 0.0
    %309 = vmatpush1.msra.mxu0 0.0
    %310 = vmatprep.subr.mxu0 0.0
    %311 = vmatpush1.msra.mxu0 0.0
    %312 = vmatprep.subr.mxu0 0.0
    %313 = vmatpush1.msra.mxu0 0.0
    %314 = vmatprep.subr.mxu0 0.0
    %315 = vmatpush1.msra.mxu0 0.0
    %316 = vmatprep.subr.mxu0 0.0
    %317 = vmatpush1.msra.mxu0 0.0
    %318 = vmatprep.subr.mxu0 0.0
    %319 = vmatpush1.msra.mxu0 0.0
    %320 = vmatprep.subr.mxu0 0.0
    %321 = vmatpush1.msra.mxu0 0.0
    %322 = vmatprep.subr.mxu0 0.0
    %323 = vmatpush1.msra.mxu0 0.0
    %324 = vmatprep.subr.mxu0 0.0
    %325 = vmatpush1.msra.mxu0 0.0
    %326 = vmatprep.subr.mxu0 0.0
    %327 = vmatpush1.msra.mxu0 0.0
    %328 = vmatprep.subr.mxu0 0.0
    %v329 = vand.u32 %v70, 4294901760
    %330 = vmatpush1.msra.mxu0 %v329
    %331 = vmatprep.subr.mxu0 0.0
    %332 = vmatpush2.msra.mxu0 0.0
    %333 = vmatprep.subr.mxu0 0.0
    %334 = vmatpush2.msra.mxu0 0.0
    %335 = vmatprep.subr.mxu0 0.0
    %336 = vmatpush2.msra.mxu0 0.0
    %337 = vmatprep.subr.mxu0 0.0
    %338 = vmatpush2.msra.mxu0 0.0
    %339 = vmatprep.subr.mxu0 0.0
    %340 = vmatpush2.msra.mxu0 0.0
    %341 = vmatprep.subr.mxu0 0.0
    %342 = vmatpush2.msra.mxu0 0.0
    %343 = vmatprep.subr.mxu0 0.0
    %344 = vmatpush2.msra.mxu0 0.0
    %345 = vmatprep.subr.mxu0 0.0
    %346 = vmatpush2.msra.mxu0 0.0
    %347 = vmatprep.subr.mxu0 0.0
    %348 = vmatpush2.msra.mxu0 0.0
    %349 = vmatprep.subr.mxu0 0.0
    %350 = vmatpush2.msra.mxu0 0.0
    %351 = vmatprep.subr.mxu0 0.0
    %352 = vmatpush2.msra.mxu0 0.0
    %353 = vmatprep.subr.mxu0 0.0
    %354 = vmatpush2.msra.mxu0 0.0
    %355 = vmatprep.subr.mxu0 0.0
    %356 = vmatpush2.msra.mxu0 0.0
    %357 = vmatprep.subr.mxu0 0.0
    %358 = vmatpush2.msra.mxu0 0.0
    %359 = vmatprep.subr.mxu0 0.0
    %360 = vmatpush2.msra.mxu0 0.0
    %361 = vmatprep.subr.mxu0 0.0
    %362 = vmatpush2.msra.mxu0 0.0
    %363 = vmatprep.mubr.f32.mxu0 0.0
    %v364 = vand.u32 %v66, 4294901760
    %v365 = vsub.f32 %v66, %v364
    %v366 = vand.u32 %v365, 4294901760
    %367 = vmatmul.mubr.f32.gmra.mxu0 %v366
    %v368 = vpop.f32.mrf.mxu0
    %v369 = vadd.f32 %v295, %v368
    %v370 = vpop.f32.mrf.mxu0
    %371 = vdwg.mxu0
    %372 = vmatprep.subr.mxu0 0.0
    %373 = vmatpush1.msra.mxu0 0.0
    %374 = vmatprep.subr.mxu0 0.0
    %375 = vmatpush1.msra.mxu0 0.0
    %376 = vmatprep.subr.mxu0 0.0
    %377 = vmatpush1.msra.mxu0 0.0
    %378 = vmatprep.subr.mxu0 0.0
    %379 = vmatpush1.msra.mxu0 0.0
    %380 = vmatprep.subr.mxu0 0.0
    %381 = vmatpush1.msra.mxu0 0.0
    %382 = vmatprep.subr.mxu0 0.0
    %383 = vmatpush1.msra.mxu0 0.0
    %384 = vmatprep.subr.mxu0 0.0
    %385 = vmatpush1.msra.mxu0 0.0
    %386 = vmatprep.subr.mxu0 0.0
    %387 = vmatpush1.msra.mxu0 0.0
    %388 = vmatprep.subr.mxu0 0.0
    %389 = vmatpush1.msra.mxu0 0.0
    %390 = vmatprep.subr.mxu0 0.0
    %391 = vmatpush1.msra.mxu0 0.0
    %392 = vmatprep.subr.mxu0 0.0
    %393 = vmatpush1.msra.mxu0 0.0
    %394 = vmatprep.subr.mxu0 0.0
    %395 = vmatpush1.msra.mxu0 0.0
    %396 = vmatprep.subr.mxu0 0.0
    %397 = vmatpush1.msra.mxu0 0.0
    %398 = vmatprep.subr.mxu0 0.0
    %399 = vmatpush1.msra.mxu0 0.0
    %400 = vmatprep.subr.mxu0 0.0
    %401 = vmatpush1.msra.mxu0 0.0
    %402 = vmatprep.subr.mxu0 0.0
    %v403 = vand.u32 %v70, 4294901760
    %v404 = vsub.f32 %v70, %v403
    %v405 = vand.u32 %v404, 4294901760
    %406 = vmatpush1.msra.mxu0 %v405
    %407 = vmatprep.subr.mxu0 0.0
    %408 = vmatpush2.msra.mxu0 0.0
    %409 = vmatprep.subr.mxu0 0.0
    %410 = vmatpush2.msra.mxu0 0.0
    %411 = vmatprep.subr.mxu0 0.0
    %412 = vmatpush2.msra.mxu0 0.0
    %413 = vmatprep.subr.mxu0 0.0
    %414 = vmatpush2.msra.mxu0 0.0
    %415 = vmatprep.subr.mxu0 0.0
    %416 = vmatpush2.msra.mxu0 0.0
    %417 = vmatprep.subr.mxu0 0.0
    %418 = vmatpush2.msra.mxu0 0.0
    %419 = vmatprep.subr.mxu0 0.0
    %420 = vmatpush2.msra.mxu0 0.0
    %421 = vmatprep.subr.mxu0 0.0
    %422 = vmatpush2.msra.mxu0 0.0
    %423 = vmatprep.subr.mxu0 0.0
    %424 = vmatpush2.msra.mxu0 0.0
    %425 = vmatprep.subr.mxu0 0.0
    %426 = vmatpush2.msra.mxu0 0.0
    %427 = vmatprep.subr.mxu0 0.0
    %428 = vmatpush2.msra.mxu0 0.0
    %429 = vmatprep.subr.mxu0 0.0
    %430 = vmatpush2.msra.mxu0 0.0
    %431 = vmatprep.subr.mxu0 0.0
    %432 = vmatpush2.msra.mxu0 0.0
    %433 = vmatprep.subr.mxu0 0.0
    %434 = vmatpush2.msra.mxu0 0.0
    %435 = vmatprep.subr.mxu0 0.0
    %436 = vmatpush2.msra.mxu0 0.0
    %437 = vmatprep.subr.mxu0 0.0
    %438 = vmatpush2.msra.mxu0 0.0
    %439 = vmatprep.mubr.f32.mxu0 0.0
    %v440 = vand.u32 %v66, 4294901760
    %441 = vmatmul.mubr.f32.gmra.mxu0 %v440
    %v442 = vpop.f32.mrf.mxu0
    %v443 = vadd.f32 %v369, %v442
    %v444 = vpop.f32.mrf.mxu0
    %445 = vdwg.mxu0
    %446 = vmatprep.subr.mxu0 0.0
    %447 = vmatpush1.msra.mxu0 0.0
    %448 = vmatprep.subr.mxu0 0.0
    %449 = vmatpush1.msra.mxu0 0.0
    %450 = vmatprep.subr.mxu0 0.0
    %451 = vmatpush1.msra.mxu0 0.0
    %452 = vmatprep.subr.mxu0 0.0
    %453 = vmatpush1.msra.mxu0 0.0
    %454 = vmatprep.subr.mxu0 0.0
    %455 = vmatpush1.msra.mxu0 0.0
    %456 = vmatprep.subr.mxu0 0.0
    %457 = vmatpush1.msra.mxu0 0.0
    %458 = vmatprep.subr.mxu0 0.0
    %459 = vmatpush1.msra.mxu0 0.0
    %460 = vmatprep.subr.mxu0 0.0
    %461 = vmatpush1.msra.mxu0 0.0
    %462 = vmatprep.subr.mxu0 0.0
    %463 = vmatpush1.msra.mxu0 0.0
    %464 = vmatprep.subr.mxu0 0.0
    %465 = vmatpush1.msra.mxu0 0.0
    %466 = vmatprep.subr.mxu0 0.0
    %467 = vmatpush1.msra.mxu0 0.0
    %468 = vmatprep.subr.mxu0 0.0
    %469 = vmatpush1.msra.mxu0 0.0
    %470 = vmatprep.subr.mxu0 0.0
    %471 = vmatpush1.msra.mxu0 0.0
    %472 = vmatprep.subr.mxu0 0.0
    %473 = vmatpush1.msra.mxu0 0.0
    %474 = vmatprep.subr.mxu0 0.0
    %475 = vmatpush1.msra.mxu0 0.0
    %476 = vmatprep.subr.mxu0 0.0
    %v477 = vand.u32 %v70, 4294901760
    %478 = vmatpush1.msra.mxu0 %v477
    %479 = vmatprep.subr.mxu0 0.0
    %480 = vmatpush2.msra.mxu0 0.0
    %481 = vmatprep.subr.mxu0 0.0
    %482 = vmatpush2.msra.mxu0 0.0
    %483 = vmatprep.subr.mxu0 0.0
    %484 = vmatpush2.msra.mxu0 0.0
    %485 = vmatprep.subr.mxu0 0.0
    %486 = vmatpush2.msra.mxu0 0.0
    %487 = vmatprep.subr.mxu0 0.0
    %488 = vmatpush2.msra.mxu0 0.0
    %489 = vmatprep.subr.mxu0 0.0
    %490 = vmatpush2.msra.mxu0 0.0
    %491 = vmatprep.subr.mxu0 0.0
    %492 = vmatpush2.msra.mxu0 0.0
    %493 = vmatprep.subr.mxu0 0.0
    %494 = vmatpush2.msra.mxu0 0.0
    %495 = vmatprep.subr.mxu0 0.0
    %496 = vmatpush2.msra.mxu0 0.0
    %497 = vmatprep.subr.mxu0 0.0
    %498 = vmatpush2.msra.mxu0 0.0
    %499 = vmatprep.subr.mxu0 0.0
    %500 = vmatpush2.msra.mxu0 0.0
    %501 = vmatprep.subr.mxu0 0.0
    %502 = vmatpush2.msra.mxu0 0.0
    %503 = vmatprep.subr.mxu0 0.0
    %504 = vmatpush2.msra.mxu0 0.0
    %505 = vmatprep.subr.mxu0 0.0
    %506 = vmatpush2.msra.mxu0 0.0
    %507 = vmatprep.subr.mxu0 0.0
    %508 = vmatpush2.msra.mxu0 0.0
    %509 = vmatprep.subr.mxu0 0.0
    %510 = vmatpush2.msra.mxu0 0.0
    %511 = vmatprep.mubr.f32.mxu0 0.0
    %v512 = vand.u32 %v66, 4294901760
    %513 = vmatmul.mubr.f32.gmra.mxu0 %v512
    %v514 = vpop.f32.mrf.mxu0
    %v515 = vadd.f32 %v443, %v514
    %v516 = vpop.f32.mrf.mxu0
    %517 = vdwg.mxu0
    %v519 = vsel %vm64, %v62, 0
    %521 = vmatprep.subr.mxu0 0.0
    %522 = vmatpush1.msra.mxu0 0.0
    %523 = vmatprep.subr.mxu0 0.0
    %524 = vmatpush1.msra.mxu0 0.0
    %525 = vmatprep.subr.mxu0 0.0
    %526 = vmatpush1.msra.mxu0 0.0
    %527 = vmatprep.subr.mxu0 0.0
    %528 = vmatpush1.msra.mxu0 0.0
    %529 = vmatprep.subr.mxu0 0.0
    %530 = vmatpush1.msra.mxu0 0.0
    %531 = vmatprep.subr.mxu0 0.0
    %532 = vmatpush1.msra.mxu0 0.0
    %533 = vmatprep.subr.mxu0 0.0
    %534 = vmatpush1.msra.mxu0 0.0
    %535 = vmatprep.subr.mxu0 0.0
    %536 = vmatpush1.msra.mxu0 0.0
    %537 = vmatprep.subr.mxu0 0.0
    %538 = vmatpush1.msra.mxu0 0.0
    %539 = vmatprep.subr.mxu0 0.0
    %540 = vmatpush1.msra.mxu0 0.0
    %541 = vmatprep.subr.mxu0 0.0
    %542 = vmatpush1.msra.mxu0 0.0
    %543 = vmatprep.subr.mxu0 0.0
    %544 = vmatpush1.msra.mxu0 0.0
    %545 = vmatprep.subr.mxu0 0.0
    %546 = vmatpush1.msra.mxu0 0.0
    %547 = vmatprep.subr.mxu0 0.0
    %548 = vmatpush1.msra.mxu0 0.0
    %549 = vmatprep.subr.mxu0 0.0
    %550 = vmatpush1.msra.mxu0 0.0
    %551 = vmatprep.subr.mxu0 0.0
    %v552 = vand.u32 %v70, 4294901760
    %553 = vmatpush1.msra.mxu0 %v552
    %554 = vmatprep.subr.mxu0 0.0
    %555 = vmatpush2.msra.mxu0 0.0
    %556 = vmatprep.subr.mxu0 0.0
    %557 = vmatpush2.msra.mxu0 0.0
    %558 = vmatprep.subr.mxu0 0.0
    %559 = vmatpush2.msra.mxu0 0.0
    %560 = vmatprep.subr.mxu0 0.0
    %561 = vmatpush2.msra.mxu0 0.0
    %562 = vmatprep.subr.mxu0 0.0
    %563 = vmatpush2.msra.mxu0 0.0
    %564 = vmatprep.subr.mxu0 0.0
    %565 = vmatpush2.msra.mxu0 0.0
    %566 = vmatprep.subr.mxu0 0.0
    %567 = vmatpush2.msra.mxu0 0.0
    %568 = vmatprep.subr.mxu0 0.0
    %569 = vmatpush2.msra.mxu0 0.0
    %570 = vmatprep.subr.mxu0 0.0
    %571 = vmatpush2.msra.mxu0 0.0
    %572 = vmatprep.subr.mxu0 0.0
    %573 = vmatpush2.msra.mxu0 0.0
    %574 = vmatprep.subr.mxu0 0.0
    %575 = vmatpush2.msra.mxu0 0.0
    %576 = vmatprep.subr.mxu0 0.0
    %577 = vmatpush2.msra.mxu0 0.0
    %578 = vmatprep.subr.mxu0 0.0
    %579 = vmatpush2.msra.mxu0 0.0
    %580 = vmatprep.subr.mxu0 0.0
    %581 = vmatpush2.msra.mxu0 0.0
    %582 = vmatprep.subr.mxu0 0.0
    %583 = vmatpush2.msra.mxu0 0.0
    %584 = vmatprep.subr.mxu0 0.0
    %585 = vmatpush2.msra.mxu0 0.0
    %586 = vmatprep.mubr.f32.mxu0 0.0
    %v587 = vand.u32 %v519, 4294901760
    %v588 = vsub.f32 %v519, %v587
    %v589 = vand.u32 %v588, 4294901760
    %v590 = vsub.f32 %v588, %v589
    %v591 = vand.u32 %v590, 4294901760
    %592 = vmatmul.mubr.f32.gmra.mxu0 %v591
    %v593 = vpop.f32.mrf.mxu0
    %v594 = vadd.f32 0.0, %v593
    %v595 = vpop.f32.mrf.mxu0
    %596 = vdwg.mxu0
    %597 = vmatprep.subr.mxu0 0.0
    %598 = vmatpush1.msra.mxu0 0.0
    %599 = vmatprep.subr.mxu0 0.0
    %600 = vmatpush1.msra.mxu0 0.0
    %601 = vmatprep.subr.mxu0 0.0
    %602 = vmatpush1.msra.mxu0 0.0
    %603 = vmatprep.subr.mxu0 0.0
    %604 = vmatpush1.msra.mxu0 0.0
    %605 = vmatprep.subr.mxu0 0.0
    %606 = vmatpush1.msra.mxu0 0.0
    %607 = vmatprep.subr.mxu0 0.0
    %608 = vmatpush1.msra.mxu0 0.0
    %609 = vmatprep.subr.mxu0 0.0
    %610 = vmatpush1.msra.mxu0 0.0
    %611 = vmatprep.subr.mxu0 0.0
    %612 = vmatpush1.msra.mxu0 0.0
    %613 = vmatprep.subr.mxu0 0.0
    %614 = vmatpush1.msra.mxu0 0.0
    %615 = vmatprep.subr.mxu0 0.0
    %616 = vmatpush1.msra.mxu0 0.0
    %617 = vmatprep.subr.mxu0 0.0
    %618 = vmatpush1.msra.mxu0 0.0
    %619 = vmatprep.subr.mxu0 0.0
    %620 = vmatpush1.msra.mxu0 0.0
    %621 = vmatprep.subr.mxu0 0.0
    %622 = vmatpush1.msra.mxu0 0.0
    %623 = vmatprep.subr.mxu0 0.0
    %624 = vmatpush1.msra.mxu0 0.0
    %625 = vmatprep.subr.mxu0 0.0
    %626 = vmatpush1.msra.mxu0 0.0
    %627 = vmatprep.subr.mxu0 0.0
    %v628 = vand.u32 %v70, 4294901760
    %v629 = vsub.f32 %v70, %v628
    %v630 = vand.u32 %v629, 4294901760
    %v631 = vsub.f32 %v629, %v630
    %v632 = vand.u32 %v631, 4294901760
    %633 = vmatpush1.msra.mxu0 %v632
    %634 = vmatprep.subr.mxu0 0.0
    %635 = vmatpush2.msra.mxu0 0.0
    %636 = vmatprep.subr.mxu0 0.0
    %637 = vmatpush2.msra.mxu0 0.0
    %638 = vmatprep.subr.mxu0 0.0
    %639 = vmatpush2.msra.mxu0 0.0
    %640 = vmatprep.subr.mxu0 0.0
    %641 = vmatpush2.msra.mxu0 0.0
    %642 = vmatprep.subr.mxu0 0.0
    %643 = vmatpush2.msra.mxu0 0.0
    %644 = vmatprep.subr.mxu0 0.0
    %645 = vmatpush2.msra.mxu0 0.0
    %646 = vmatprep.subr.mxu0 0.0
    %647 = vmatpush2.msra.mxu0 0.0
    %648 = vmatprep.subr.mxu0 0.0
    %649 = vmatpush2.msra.mxu0 0.0
    %650 = vmatprep.subr.mxu0 0.0
    %651 = vmatpush2.msra.mxu0 0.0
    %652 = vmatprep.subr.mxu0 0.0
    %653 = vmatpush2.msra.mxu0 0.0
    %654 = vmatprep.subr.mxu0 0.0
    %655 = vmatpush2.msra.mxu0 0.0
    %656 = vmatprep.subr.mxu0 0.0
    %657 = vmatpush2.msra.mxu0 0.0
    %658 = vmatprep.subr.mxu0 0.0
    %659 = vmatpush2.msra.mxu0 0.0
    %660 = vmatprep.subr.mxu0 0.0
    %661 = vmatpush2.msra.mxu0 0.0
    %662 = vmatprep.subr.mxu0 0.0
    %663 = vmatpush2.msra.mxu0 0.0
    %664 = vmatprep.subr.mxu0 0.0
    %665 = vmatpush2.msra.mxu0 0.0
    %666 = vmatprep.mubr.f32.mxu0 0.0
    %v667 = vand.u32 %v519, 4294901760
    %668 = vmatmul.mubr.f32.gmra.mxu0 %v667
    %v669 = vpop.f32.mrf.mxu0
    %v670 = vadd.f32 %v594, %v669
    %v671 = vpop.f32.mrf.mxu0
    %672 = vdwg.mxu0
    %673 = vmatprep.subr.mxu0 0.0
    %674 = vmatpush1.msra.mxu0 0.0
    %675 = vmatprep.subr.mxu0 0.0
    %676 = vmatpush1.msra.mxu0 0.0
    %677 = vmatprep.subr.mxu0 0.0
    %678 = vmatpush1.msra.mxu0 0.0
    %679 = vmatprep.subr.mxu0 0.0
    %680 = vmatpush1.msra.mxu0 0.0
    %681 = vmatprep.subr.mxu0 0.0
    %682 = vmatpush1.msra.mxu0 0.0
    %683 = vmatprep.subr.mxu0 0.0
    %684 = vmatpush1.msra.mxu0 0.0
    %685 = vmatprep.subr.mxu0 0.0
    %686 = vmatpush1.msra.mxu0 0.0
    %687 = vmatprep.subr.mxu0 0.0
    %688 = vmatpush1.msra.mxu0 0.0
    %689 = vmatprep.subr.mxu0 0.0
    %690 = vmatpush1.msra.mxu0 0.0
    %691 = vmatprep.subr.mxu0 0.0
    %692 = vmatpush1.msra.mxu0 0.0
    %693 = vmatprep.subr.mxu0 0.0
    %694 = vmatpush1.msra.mxu0 0.0
    %695 = vmatprep.subr.mxu0 0.0
    %696 = vmatpush1.msra.mxu0 0.0
    %697 = vmatprep.subr.mxu0 0.0
    %698 = vmatpush1.msra.mxu0 0.0
    %699 = vmatprep.subr.mxu0 0.0
    %700 = vmatpush1.msra.mxu0 0.0
    %701 = vmatprep.subr.mxu0 0.0
    %702 = vmatpush1.msra.mxu0 0.0
    %703 = vmatprep.subr.mxu0 0.0
    %v704 = vand.u32 %v70, 4294901760
    %v705 = vsub.f32 %v70, %v704
    %706 = vmatpush1.msra.mxu0 %v705
    %707 = vmatprep.subr.mxu0 0.0
    %708 = vmatpush2.msra.mxu0 0.0
    %709 = vmatprep.subr.mxu0 0.0
    %710 = vmatpush2.msra.mxu0 0.0
    %711 = vmatprep.subr.mxu0 0.0
    %712 = vmatpush2.msra.mxu0 0.0
    %713 = vmatprep.subr.mxu0 0.0
    %714 = vmatpush2.msra.mxu0 0.0
    %715 = vmatprep.subr.mxu0 0.0
    %716 = vmatpush2.msra.mxu0 0.0
    %717 = vmatprep.subr.mxu0 0.0
    %718 = vmatpush2.msra.mxu0 0.0
    %719 = vmatprep.subr.mxu0 0.0
    %720 = vmatpush2.msra.mxu0 0.0
    %721 = vmatprep.subr.mxu0 0.0
    %722 = vmatpush2.msra.mxu0 0.0
    %723 = vmatprep.subr.mxu0 0.0
    %724 = vmatpush2.msra.mxu0 0.0
    %725 = vmatprep.subr.mxu0 0.0
    %726 = vmatpush2.msra.mxu0 0.0
    %727 = vmatprep.subr.mxu0 0.0
    %728 = vmatpush2.msra.mxu0 0.0
    %729 = vmatprep.subr.mxu0 0.0
    %730 = vmatpush2.msra.mxu0 0.0
    %731 = vmatprep.subr.mxu0 0.0
    %732 = vmatpush2.msra.mxu0 0.0
    %733 = vmatprep.subr.mxu0 0.0
    %734 = vmatpush2.msra.mxu0 0.0
    %735 = vmatprep.subr.mxu0 0.0
    %736 = vmatpush2.msra.mxu0 0.0
    %737 = vmatprep.subr.mxu0 0.0
    %738 = vmatpush2.msra.mxu0 0.0
    %739 = vmatprep.mubr.f32.mxu0 0.0
    %v740 = vand.u32 %v519, 4294901760
    %v741 = vsub.f32 %v519, %v740
    %742 = vmatmul.mubr.f32.gmra.mxu0 %v741
    %v743 = vpop.f32.mrf.mxu0
    %v744 = vadd.f32 %v670, %v743
    %v745 = vpop.f32.mrf.mxu0
    %746 = vdwg.mxu0
    %747 = vmatprep.subr.mxu0 0.0
    %748 = vmatpush1.msra.mxu0 0.0
    %749 = vmatprep.subr.mxu0 0.0
    %750 = vmatpush1.msra.mxu0 0.0
    %751 = vmatprep.subr.mxu0 0.0
    %752 = vmatpush1.msra.mxu0 0.0
    %753 = vmatprep.subr.mxu0 0.0
    %754 = vmatpush1.msra.mxu0 0.0
    %755 = vmatprep.subr.mxu0 0.0
    %756 = vmatpush1.msra.mxu0 0.0
    %757 = vmatprep.subr.mxu0 0.0
    %758 = vmatpush1.msra.mxu0 0.0
    %759 = vmatprep.subr.mxu0 0.0
    %760 = vmatpush1.msra.mxu0 0.0
    %761 = vmatprep.subr.mxu0 0.0
    %762 = vmatpush1.msra.mxu0 0.0
    %763 = vmatprep.subr.mxu0 0.0
    %764 = vmatpush1.msra.mxu0 0.0
    %765 = vmatprep.subr.mxu0 0.0
    %766 = vmatpush1.msra.mxu0 0.0
    %767 = vmatprep.subr.mxu0 0.0
    %768 = vmatpush1.msra.mxu0 0.0
    %769 = vmatprep.subr.mxu0 0.0
    %770 = vmatpush1.msra.mxu0 0.0
    %771 = vmatprep.subr.mxu0 0.0
    %772 = vmatpush1.msra.mxu0 0.0
    %773 = vmatprep.subr.mxu0 0.0
    %774 = vmatpush1.msra.mxu0 0.0
    %775 = vmatprep.subr.mxu0 0.0
    %776 = vmatpush1.msra.mxu0 0.0
    %777 = vmatprep.subr.mxu0 0.0
    %v778 = vand.u32 %v70, 4294901760
    %779 = vmatpush1.msra.mxu0 %v778
    %780 = vmatprep.subr.mxu0 0.0
    %781 = vmatpush2.msra.mxu0 0.0
    %782 = vmatprep.subr.mxu0 0.0
    %783 = vmatpush2.msra.mxu0 0.0
    %784 = vmatprep.subr.mxu0 0.0
    %785 = vmatpush2.msra.mxu0 0.0
    %786 = vmatprep.subr.mxu0 0.0
    %787 = vmatpush2.msra.mxu0 0.0
    %788 = vmatprep.subr.mxu0 0.0
    %789 = vmatpush2.msra.mxu0 0.0
    %790 = vmatprep.subr.mxu0 0.0
    %791 = vmatpush2.msra.mxu0 0.0
    %792 = vmatprep.subr.mxu0 0.0
    %793 = vmatpush2.msra.mxu0 0.0
    %794 = vmatprep.subr.mxu0 0.0
    %795 = vmatpush2.msra.mxu0 0.0
    %796 = vmatprep.subr.mxu0 0.0
    %797 = vmatpush2.msra.mxu0 0.0
    %798 = vmatprep.subr.mxu0 0.0
    %799 = vmatpush2.msra.mxu0 0.0
    %800 = vmatprep.subr.mxu0 0.0
    %801 = vmatpush2.msra.mxu0 0.0
    %802 = vmatprep.subr.mxu0 0.0
    %803 = vmatpush2.msra.mxu0 0.0
    %804 = vmatprep.subr.mxu0 0.0
    %805 = vmatpush2.msra.mxu0 0.0
    %806 = vmatprep.subr.mxu0 0.0
    %807 = vmatpush2.msra.mxu0 0.0
    %808 = vmatprep.subr.mxu0 0.0
    %809 = vmatpush2.msra.mxu0 0.0
    %810 = vmatprep.subr.mxu0 0.0
    %811 = vmatpush2.msra.mxu0 0.0
    %812 = vmatprep.mubr.f32.mxu0 0.0
    %v813 = vand.u32 %v519, 4294901760
    %v814 = vsub.f32 %v519, %v813
    %v815 = vand.u32 %v814, 4294901760
    %816 = vmatmul.mubr.f32.gmra.mxu0 %v815
    %v817 = vpop.f32.mrf.mxu0
    %v818 = vadd.f32 %v744, %v817
    %v819 = vpop.f32.mrf.mxu0
    %820 = vdwg.mxu0
    %821 = vmatprep.subr.mxu0 0.0
    %822 = vmatpush1.msra.mxu0 0.0
    %823 = vmatprep.subr.mxu0 0.0
    %824 = vmatpush1.msra.mxu0 0.0
    %825 = vmatprep.subr.mxu0 0.0
    %826 = vmatpush1.msra.mxu0 0.0
    %827 = vmatprep.subr.mxu0 0.0
    %828 = vmatpush1.msra.mxu0 0.0
    %829 = vmatprep.subr.mxu0 0.0
    %830 = vmatpush1.msra.mxu0 0.0
    %831 = vmatprep.subr.mxu0 0.0
    %832 = vmatpush1.msra.mxu0 0.0
    %833 = vmatprep.subr.mxu0 0.0
    %834 = vmatpush1.msra.mxu0 0.0
    %835 = vmatprep.subr.mxu0 0.0
    %836 = vmatpush1.msra.mxu0 0.0
    %837 = vmatprep.subr.mxu0 0.0
    %838 = vmatpush1.msra.mxu0 0.0
    %839 = vmatprep.subr.mxu0 0.0
    %840 = vmatpush1.msra.mxu0 0.0
    %841 = vmatprep.subr.mxu0 0.0
    %842 = vmatpush1.msra.mxu0 0.0
    %843 = vmatprep.subr.mxu0 0.0
    %844 = vmatpush1.msra.mxu0 0.0
    %845 = vmatprep.subr.mxu0 0.0
    %846 = vmatpush1.msra.mxu0 0.0
    %847 = vmatprep.subr.mxu0 0.0
    %848 = vmatpush1.msra.mxu0 0.0
    %849 = vmatprep.subr.mxu0 0.0
    %850 = vmatpush1.msra.mxu0 0.0
    %851 = vmatprep.subr.mxu0 0.0
    %v852 = vand.u32 %v70, 4294901760
    %v853 = vsub.f32 %v70, %v852
    %v854 = vand.u32 %v853, 4294901760
    %855 = vmatpush1.msra.mxu0 %v854
    %856 = vmatprep.subr.mxu0 0.0
    %857 = vmatpush2.msra.mxu0 0.0
    %858 = vmatprep.subr.mxu0 0.0
    %859 = vmatpush2.msra.mxu0 0.0
    %860 = vmatprep.subr.mxu0 0.0
    %861 = vmatpush2.msra.mxu0 0.0
    %862 = vmatprep.subr.mxu0 0.0
    %863 = vmatpush2.msra.mxu0 0.0
    %864 = vmatprep.subr.mxu0 0.0
    %865 = vmatpush2.msra.mxu0 0.0
    %866 = vmatprep.subr.mxu0 0.0
    %867 = vmatpush2.msra.mxu0 0.0
    %868 = vmatprep.subr.mxu0 0.0
    %869 = vmatpush2.msra.mxu0 0.0
    %870 = vmatprep.subr.mxu0 0.0
    %871 = vmatpush2.msra.mxu0 0.0
    %872 = vmatprep.subr.mxu0 0.0
    %873 = vmatpush2.msra.mxu0 0.0
    %874 = vmatprep.subr.mxu0 0.0
    %875 = vmatpush2.msra.mxu0 0.0
    %876 = vmatprep.subr.mxu0 0.0
    %877 = vmatpush2.msra.mxu0 0.0
    %878 = vmatprep.subr.mxu0 0.0
    %879 = vmatpush2.msra.mxu0 0.0
    %880 = vmatprep.subr.mxu0 0.0
    %881 = vmatpush2.msra.mxu0 0.0
    %882 = vmatprep.subr.mxu0 0.0
    %883 = vmatpush2.msra.mxu0 0.0
    %884 = vmatprep.subr.mxu0 0.0
    %885 = vmatpush2.msra.mxu0 0.0
    %886 = vmatprep.subr.mxu0 0.0
    %887 = vmatpush2.msra.mxu0 0.0
    %888 = vmatprep.mubr.f32.mxu0 0.0
    %v889 = vand.u32 %v519, 4294901760
    %890 = vmatmul.mubr.f32.gmra.mxu0 %v889
    %v891 = vpop.f32.mrf.mxu0
    %v892 = vadd.f32 %v818, %v891
    %v893 = vpop.f32.mrf.mxu0
    %894 = vdwg.mxu0
    %895 = vmatprep.subr.mxu0 0.0
    %896 = vmatpush1.msra.mxu0 0.0
    %897 = vmatprep.subr.mxu0 0.0
    %898 = vmatpush1.msra.mxu0 0.0
    %899 = vmatprep.subr.mxu0 0.0
    %900 = vmatpush1.msra.mxu0 0.0
    %901 = vmatprep.subr.mxu0 0.0
    %902 = vmatpush1.msra.mxu0 0.0
    %903 = vmatprep.subr.mxu0 0.0
    %904 = vmatpush1.msra.mxu0 0.0
    %905 = vmatprep.subr.mxu0 0.0
    %906 = vmatpush1.msra.mxu0 0.0
    %907 = vmatprep.subr.mxu0 0.0
    %908 = vmatpush1.msra.mxu0 0.0
    %909 = vmatprep.subr.mxu0 0.0
    %910 = vmatpush1.msra.mxu0 0.0
    %911 = vmatprep.subr.mxu0 0.0
    %912 = vmatpush1.msra.mxu0 0.0
    %913 = vmatprep.subr.mxu0 0.0
    %914 = vmatpush1.msra.mxu0 0.0
    %915 = vmatprep.subr.mxu0 0.0
    %916 = vmatpush1.msra.mxu0 0.0
    %917 = vmatprep.subr.mxu0 0.0
    %918 = vmatpush1.msra.mxu0 0.0
    %919 = vmatprep.subr.mxu0 0.0
    %920 = vmatpush1.msra.mxu0 0.0
    %921 = vmatprep.subr.mxu0 0.0
    %922 = vmatpush1.msra.mxu0 0.0
    %923 = vmatprep.subr.mxu0 0.0
    %924 = vmatpush1.msra.mxu0 0.0
    %925 = vmatprep.subr.mxu0 0.0
    %v926 = vand.u32 %v70, 4294901760
    %927 = vmatpush1.msra.mxu0 %v926
    %928 = vmatprep.subr.mxu0 0.0
    %929 = vmatpush2.msra.mxu0 0.0
    %930 = vmatprep.subr.mxu0 0.0
    %931 = vmatpush2.msra.mxu0 0.0
    %932 = vmatprep.subr.mxu0 0.0
    %933 = vmatpush2.msra.mxu0 0.0
    %934 = vmatprep.subr.mxu0 0.0
    %935 = vmatpush2.msra.mxu0 0.0
    %936 = vmatprep.subr.mxu0 0.0
    %937 = vmatpush2.msra.mxu0 0.0
    %938 = vmatprep.subr.mxu0 0.0
    %939 = vmatpush2.msra.mxu0 0.0
    %940 = vmatprep.subr.mxu0 0.0
    %941 = vmatpush2.msra.mxu0 0.0
    %942 = vmatprep.subr.mxu0 0.0
    %943 = vmatpush2.msra.mxu0 0.0
    %944 = vmatprep.subr.mxu0 0.0
    %945 = vmatpush2.msra.mxu0 0.0
    %946 = vmatprep.subr.mxu0 0.0
    %947 = vmatpush2.msra.mxu0 0.0
    %948 = vmatprep.subr.mxu0 0.0
    %949 = vmatpush2.msra.mxu0 0.0
    %950 = vmatprep.subr.mxu0 0.0
    %951 = vmatpush2.msra.mxu0 0.0
    %952 = vmatprep.subr.mxu0 0.0
    %953 = vmatpush2.msra.mxu0 0.0
    %954 = vmatprep.subr.mxu0 0.0
    %955 = vmatpush2.msra.mxu0 0.0
    %956 = vmatprep.subr.mxu0 0.0
    %957 = vmatpush2.msra.mxu0 0.0
    %958 = vmatprep.subr.mxu0 0.0
    %959 = vmatpush2.msra.mxu0 0.0
    %960 = vmatprep.mubr.f32.mxu0 0.0
    %v961 = vand.u32 %v519, 4294901760
    %962 = vmatmul.mubr.f32.gmra.mxu0 %v961
    %v963 = vpop.f32.mrf.mxu0
    %v964 = vadd.f32 %v892, %v963
    %v965 = vpop.f32.mrf.mxu0
    %966 = vdwg.mxu0
    %v967 = vmul.f32 %v515, %v59
    %968 = vst [vmem:[#allocation9] sm:$0x3] %v967
    %v969 = vmul.f32 %v964, %v60
    %v970 = vadd.f32 %v967, %v969
    %971 = vst [vmem:[#allocation8] sm:$0x3] %v970
    // Predicated region
    $region34: #{tpu_custom_call.1} parent=1 // pred_check
      _
    $region35: #{tpu_custom_call.1} parent=1 // pred_check_branch
      %973 = sbr.rel (0) target = $region37
    $region36: #{tpu_custom_call.1} parent=1 // pred_region
      %s975 = ssub.s32 32, 32
      %976 = vsyncadd [#allocation4], %s975
      %s978 = sshll.u32 [#allocation8], 4
      %s979 = int_to_ptr.vmem [resolvable:$true] %s978
      %981 = dma.vmem_to_hbm [thread:$0]  %s979, 32, %s5, [#allocation4]
    $region37: #{tpu_custom_call.1} parent=1 // pred_fallthru
      _
    // Predicated region
    $region38: #{tpu_custom_call.1} parent=1 // pred_check
      _
    $region39: #{tpu_custom_call.1} parent=1 // pred_check_branch
      %983 = sbr.rel (0) target = $region41
    $region40: #{tpu_custom_call.1} parent=1 // pred_region
      %s985 = ssub.s32 32, 32
      %986 = vsyncadd [#allocation10], %s985
      %s988 = sshll.u32 [#allocation9], 4
      %s989 = int_to_ptr.vmem [resolvable:$true] %s988
      %991 = dma.vmem_to_hbm [thread:$0]  %s989, 32, %s6, [#allocation10]
    $region41: #{tpu_custom_call.1} parent=1 // pred_fallthru
      _
    // Predicated region
    $region42: #{tpu_custom_call.1} parent=1 // pred_check
      _
    $region43: #{tpu_custom_call.1} parent=1 // pred_check_branch
      %993 = sbr.rel (0) target = $region45
    $region44: #{tpu_custom_call.1} parent=1 // pred_region
      %994 = dma.done [#allocation4], 32
    $region45: #{tpu_custom_call.1} parent=1 // pred_fallthru
      _
    // Predicated region
    $region46: #{tpu_custom_call.1} parent=1 // pred_check
      _
    $region47: #{tpu_custom_call.1} parent=1 // pred_check_branch
      %996 = sbr.rel (0) target = $region49
    $region48: #{tpu_custom_call.1} parent=1 // pred_region
      %997 = dma.done [#allocation10], 32
    $region49: #{tpu_custom_call.1} parent=1 // pred_fallthru
      _
    %998 = vsyncpa [#allocation3], 1
    %999 = vsyncpa [#allocation6], 1
    %1000 = vsyncpa [#allocation4], 1
    %1001 = vsyncpa [#allocation10], 1

</llo_original>
